<compile_context>
chip_gen: v7x
topology: tpu7x:2x2x1
jax: 0.10.0
libtpu: 0.0.40
codegen_flags: <defaults>
</compile_context>

<pallas_src>
import jax
import jax.numpy as jnp
from jax.experimental import pallas as pl
from jax.experimental.pallas import tpu as pltpu


def _mlp_kernel(xT_ref, w1_ref, b1_ref, w2_ref, b2_ref, w3_ref, b3_ref, o_ref):
    # xT_ref: (14, TB) bf16   weights: bf16   biases: f32   output: (1, TB) f32
    xT = xT_ref[...]

    # Layer 1: (64, 14) @ (14, TB) -> (64, TB), f32 accumulation on the MXU.
    h1 = jnp.dot(w1_ref[...], xT, preferred_element_type=jnp.float32) + b1_ref[...]
    h1 = jnp.maximum(h1, 0.0)

    # Layer 2: (64, 64) @ (64, TB) -> (64, TB).  Cast activation to bf16 so the
    # MXU runs at bf16 throughput; accumulate in f32.
    h2 = jnp.dot(w2_ref[...], h1.astype(w2_ref.dtype),
                 preferred_element_type=jnp.float32) + b2_ref[...]
    h2 = jnp.maximum(h2, 0.0)

    # Layer 3: (1, 64) @ (64, TB) -> (1, TB), lane-dense output tile.
    out = jnp.dot(w3_ref[...], h2.astype(w3_ref.dtype),
                  preferred_element_type=jnp.float32) + b3_ref[...]
    o_ref[...] = out.astype(o_ref.dtype)


def transition_prediction_forward(x, params, *, max_tile=1024):
    """Fused MLP forward pass.

    x: (batch, input_dim) float32
    params: dict with w1 (64,14), b1 (64,1), w2 (64,64), b2 (64,1),
            w3 (1,64), b3 (1,1), all float32 (PyTorch (out,in) layout).
    returns: (batch, 1) float32
    """
    batch, input_dim = x.shape
    hidden = params["w1"].shape[0]

    # bf16 matmul operands (f32 accumulation inside the kernel); biases stay f32.
    xT = jnp.asarray(x, jnp.bfloat16).T            # (input_dim, batch), batch on lanes
    w1 = jnp.asarray(params["w1"], jnp.bfloat16)   # (64, 14)
    w2 = jnp.asarray(params["w2"], jnp.bfloat16)   # (64, 64)
    w3 = jnp.asarray(params["w3"], jnp.bfloat16)   # (1, 64)
    b1 = jnp.asarray(params["b1"], jnp.float32)    # (64, 1)
    b2 = jnp.asarray(params["b2"], jnp.float32)    # (64, 1)
    b3 = jnp.asarray(params["b3"], jnp.float32)    # (1, 1)

    # Batch tile: whole batch if small (block == full dim is always legal),
    # otherwise a large lane-aligned tile (multiple of 128) for pipelining.
    tb = batch if batch <= max_tile else max_tile
    grid = (pl.cdiv(batch, tb),)

    def const_spec(shape):
        # Weights/biases: same block every grid step -> stay resident in VMEM.
        return pl.BlockSpec(shape, lambda i: (0, 0))

    flops = 2 * batch * (input_dim * hidden + hidden * hidden + hidden)
    bytes_accessed = (
        xT.size * 2 + batch * 4                      # x in (bf16), out (f32)
        + (w1.size + w2.size + w3.size) * 2          # bf16 weights
        + (b1.size + b2.size + b3.size) * 4          # f32 biases
    )

    out = pl.pallas_call(
        _mlp_kernel,
        out_shape=jax.ShapeDtypeStruct((1, batch), jnp.float32),
        grid=grid,
        in_specs=[
            pl.BlockSpec((input_dim, tb), lambda i: (0, i)),   # x tile (pipelined)
            const_spec(w1.shape), const_spec(b1.shape),
            const_spec(w2.shape), const_spec(b2.shape),
            const_spec(w3.shape), const_spec(b3.shape),
        ],
        out_specs=pl.BlockSpec((1, tb), lambda i: (0, i)),     # lane-dense output
        compiler_params=pltpu.CompilerParams(
            dimension_semantics=("parallel",),    # shard batch tiles across TCs (v7x)
            vmem_limit_bytes=32 * 1024 * 1024,    # sized for v7x's 64 MiB VMEM
        ),
        cost_estimate=pl.CostEstimate(
            flops=flops, transcendentals=0, bytes_accessed=bytes_accessed),
    )(xT, w1, b1, w2, b2, w3, b3)

    # (1, batch) -> (batch, 1); edge-block padding (if any) never reaches here
    # because out_shape is exactly (1, batch).
    return out.reshape(batch, 1)


def init_params(key, input_dim=14, hidden=64):
    """PyTorch-style (uniform Kaiming) init, stored in PyTorch (out, in) layout."""
    ks = jax.random.split(key, 6)

    def lin(kw, kb, fan_in, fan_out):
        bound = 1.0 / jnp.sqrt(jnp.float32(fan_in))
        w = jax.random.uniform(kw, (fan_out, fan_in), jnp.float32, -bound, bound)
        b = jax.random.uniform(kb, (fan_out, 1), jnp.float32, -bound, bound)
        return w, b

    w1, b1 = lin(ks[0], ks[1], input_dim, hidden)
    w2, b2 = lin(ks[2], ks[3], hidden, hidden)
    w3, b3 = lin(ks[4], ks[5], hidden, 1)
    return {"w1": w1, "b1": b1, "w2": w2, "b2": b2, "w3": w3, "b3": b3}


def reference_forward(x, p):
    """Pure-JAX f32 reference with PyTorch semantics: x @ W.T + b."""
    h1 = jnp.maximum(x @ p["w1"].T + p["b1"].T, 0.0)
    h2 = jnp.maximum(h1 @ p["w2"].T + p["b2"].T, 0.0)
    return h2 @ p["w3"].T + p["b3"].T


if __name__ == "__main__":
    key = jax.random.PRNGKey(0)
    k_param, k_x = jax.random.split(key)

    batch, input_dim = 8, 14
    params = init_params(k_param, input_dim=input_dim)
    x = jax.random.normal(k_x, (batch, input_dim), jnp.float32)

    out = transition_prediction_forward(x, params)
    out = jax.block_until_ready(out)

    ref = reference_forward(x, params)
    assert out.shape == (batch, 1), out.shape
    # Loose tolerance: kernel uses bf16 matmul operands with f32 accumulation.
    assert jnp.allclose(out, ref, atol=5e-2, rtol=5e-2), "mismatch vs JAX reference"

    print("KERNEL_OK")
</pallas_src>

<mosaic_0001>
module attributes {stable_mosaic.version = 11 : i64} {
  func.func @_mlp_kernel(%arg0: i32, %arg1: memref<14x8xbf16, #tpu.memory_space<vmem>>, %arg2: memref<64x14xbf16, #tpu.memory_space<vmem>>, %arg3: memref<64x1xf32, #tpu.memory_space<vmem>>, %arg4: memref<64x64xbf16, #tpu.memory_space<vmem>>, %arg5: memref<64x1xf32, #tpu.memory_space<vmem>>, %arg6: memref<1x64xbf16, #tpu.memory_space<vmem>>, %arg7: memref<1x1xf32, #tpu.memory_space<vmem>>, %arg8: memref<1x8xf32, #tpu.memory_space<vmem>>) attributes {dimension_semantics = [#tpu.dimension_semantics<parallel>], iteration_bounds = array<i64: 1>, scalar_prefetch = 0 : i64, scratch_operands = 0 : i64, tpu.core_type = #tpu.core_type<tc>, window_params = [{transform_indices = @transform_0, window_bounds = array<i64: 14, 8>}, {pipeline_mode = #tpu.pipeline_mode<synchronous>, transform_indices = @transform_1, window_bounds = array<i64: 64, 14>}, {pipeline_mode = #tpu.pipeline_mode<synchronous>, transform_indices = @transform_2, window_bounds = array<i64: 64, 1>}, {pipeline_mode = #tpu.pipeline_mode<synchronous>, transform_indices = @transform_3, window_bounds = array<i64: 64, 64>}, {pipeline_mode = #tpu.pipeline_mode<synchronous>, transform_indices = @transform_4, window_bounds = array<i64: 64, 1>}, {pipeline_mode = #tpu.pipeline_mode<synchronous>, transform_indices = @transform_5, window_bounds = array<i64: 1, 64>}, {pipeline_mode = #tpu.pipeline_mode<synchronous>, transform_indices = @transform_6, window_bounds = array<i64: 1, 1>}, {transform_indices = @transform_7, window_bounds = array<i64: 1, 8>}]} {
    %c0 = arith.constant 0 : index
    %c0_0 = arith.constant 0 : index
    %0 = vector.load %arg1[%c0, %c0_0] : memref<14x8xbf16, #tpu.memory_space<vmem>>, vector<14x8xbf16>
    %c0_1 = arith.constant 0 : index
    %c0_2 = arith.constant 0 : index
    %1 = vector.load %arg2[%c0_1, %c0_2] : memref<64x14xbf16, #tpu.memory_space<vmem>>, vector<64x14xbf16>
    %cst = arith.constant dense<0.000000e+00> : vector<64x8xf32>
    %2 = tpu.matmul %1, %0, %cst {dimension_numbers = #tpu.dot_dimension_numbers<[1], [0], [0], [1], [0, 0, 1, 1], [], []>} : vector<64x14xbf16>, vector<14x8xbf16>, vector<64x8xf32> -> vector<64x8xf32>
    %c0_3 = arith.constant 0 : index
    %c0_4 = arith.constant 0 : index
    %3 = vector.load %arg3[%c0_3, %c0_4] : memref<64x1xf32, #tpu.memory_space<vmem>>, vector<64x1xf32>
    %4 = vector.broadcast %3 : vector<64x1xf32> to vector<64x8xf32>
    %5 = arith.addf %2, %4 : vector<64x8xf32>
    %cst_5 = arith.constant 0.000000e+00 : f32
    %6 = vector.broadcast %cst_5 : f32 to vector<64x8xf32>
    %7 = arith.maximumf %5, %6 : vector<64x8xf32>
    %c0_6 = arith.constant 0 : index
    %c0_7 = arith.constant 0 : index
    %8 = vector.load %arg4[%c0_6, %c0_7] : memref<64x64xbf16, #tpu.memory_space<vmem>>, vector<64x64xbf16>
    %9 = arith.truncf %7 : vector<64x8xf32> to vector<64x8xbf16>
    %cst_8 = arith.constant dense<0.000000e+00> : vector<64x8xf32>
    %10 = tpu.matmul %8, %9, %cst_8 {dimension_numbers = #tpu.dot_dimension_numbers<[1], [0], [0], [1], [0, 0, 1, 1], [], []>} : vector<64x64xbf16>, vector<64x8xbf16>, vector<64x8xf32> -> vector<64x8xf32>
    %c0_9 = arith.constant 0 : index
    %c0_10 = arith.constant 0 : index
    %11 = vector.load %arg5[%c0_9, %c0_10] : memref<64x1xf32, #tpu.memory_space<vmem>>, vector<64x1xf32>
    %12 = vector.broadcast %11 : vector<64x1xf32> to vector<64x8xf32>
    %13 = arith.addf %10, %12 : vector<64x8xf32>
    %cst_11 = arith.constant 0.000000e+00 : f32
    %14 = vector.broadcast %cst_11 : f32 to vector<64x8xf32>
    %15 = arith.maximumf %13, %14 : vector<64x8xf32>
    %c0_12 = arith.constant 0 : index
    %c0_13 = arith.constant 0 : index
    %16 = vector.load %arg6[%c0_12, %c0_13] : memref<1x64xbf16, #tpu.memory_space<vmem>>, vector<1x64xbf16>
    %17 = arith.truncf %15 : vector<64x8xf32> to vector<64x8xbf16>
    %cst_14 = arith.constant dense<0.000000e+00> : vector<1x8xf32>
    %18 = tpu.matmul %16, %17, %cst_14 {dimension_numbers = #tpu.dot_dimension_numbers<[1], [0], [0], [1], [0, 0, 1, 1], [], []>} : vector<1x64xbf16>, vector<64x8xbf16>, vector<1x8xf32> -> vector<1x8xf32>
    %c0_15 = arith.constant 0 : index
    %c0_16 = arith.constant 0 : index
    %19 = vector.load %arg7[%c0_15, %c0_16] : memref<1x1xf32, #tpu.memory_space<vmem>>, vector<1x1xf32>
    %20 = vector.broadcast %19 : vector<1x1xf32> to vector<1x8xf32>
    %21 = arith.addf %18, %20 : vector<1x8xf32>
    %c0_17 = arith.constant 0 : index
    %c0_18 = arith.constant 0 : index
    %22 = vector.load %arg8[%c0_17, %c0_18] : memref<1x8xf32, #tpu.memory_space<vmem>>, vector<1x8xf32>
    tpu.vector_store %arg8[%c0_17, %c0_18], %21 {strides = array<i32>} : memref<1x8xf32, #tpu.memory_space<vmem>>, vector<1x8xf32>,
    return
  }
  func.func @transform_0(%arg0: i32) -> (i32, i32) {
    %c0_i32 = arith.constant 0 : i32
    %c0_i32_0 = arith.constant 0 : i32
    return %c0_i32, %arg0 : i32, i32
  }
  func.func @transform_1(%arg0: i32) -> (i32, i32) {
    %c0_i32 = arith.constant 0 : i32
    %c0_i32_0 = arith.constant 0 : i32
    %c0_i32_1 = arith.constant 0 : i32
    return %c0_i32, %c0_i32_0 : i32, i32
  }
  func.func @transform_2(%arg0: i32) -> (i32, i32) {
    %c0_i32 = arith.constant 0 : i32
    %c0_i32_0 = arith.constant 0 : i32
    %c0_i32_1 = arith.constant 0 : i32
    return %c0_i32, %c0_i32_0 : i32, i32
  }
  func.func @transform_3(%arg0: i32) -> (i32, i32) {
    %c0_i32 = arith.constant 0 : i32
    %c0_i32_0 = arith.constant 0 : i32
    %c0_i32_1 = arith.constant 0 : i32
    return %c0_i32, %c0_i32_0 : i32, i32
  }
  func.func @transform_4(%arg0: i32) -> (i32, i32) {
    %c0_i32 = arith.constant 0 : i32
    %c0_i32_0 = arith.constant 0 : i32
    %c0_i32_1 = arith.constant 0 : i32
    return %c0_i32, %c0_i32_0 : i32, i32
  }
  func.func @transform_5(%arg0: i32) -> (i32, i32) {
    %c0_i32 = arith.constant 0 : i32
    %c0_i32_0 = arith.constant 0 : i32
    %c0_i32_1 = arith.constant 0 : i32
    return %c0_i32, %c0_i32_0 : i32, i32
  }
  func.func @transform_6(%arg0: i32) -> (i32, i32) {
    %c0_i32 = arith.constant 0 : i32
    %c0_i32_0 = arith.constant 0 : i32
    %c0_i32_1 = arith.constant 0 : i32
    return %c0_i32, %c0_i32_0 : i32, i32
  }
  func.func @transform_7(%arg0: i32) -> (i32, i32) {
    %c0_i32 = arith.constant 0 : i32
    %c0_i32_0 = arith.constant 0 : i32
    return %c0_i32, %arg0 : i32, i32
  }
}

</mosaic_0001>

<llo_original>
// kernel: tpu_custom_call.1
$region0: #{tpu_custom_call.1}
  #allocation0 [shape = 'u32[]', space=smem, size = 0x4, offset = 0x4, fixed_abs, tag = 'smem constant byte address 0x4 - core index']
  #allocation1 [shape = 'u32[144,128]{1,0:T(1,128)}', space=vmem, size = 0x12000, scoped, tag = 'internal scratch']
  #allocation2 [shape = 'f32[1,1]{1,0:T(1,128)S(1)}', space=vmem, size = 0x200, scoped, tag = 'scoped memory for tpu_custom_call.1']
  %s0 = inlined_call_operand.vmem [shape: bf16[14,8], index: 0, kind: input, shape index: {}]
  %s1 = inlined_call_operand.vmem [shape: bf16[64,14], index: 1, kind: input, shape index: {}]
  %s2 = inlined_call_operand.vmem [shape: f32[64,1], index: 2, kind: input, shape index: {}]
  %s3 = inlined_call_operand.vmem [shape: bf16[64,64], index: 3, kind: input, shape index: {}]
  %s4 = inlined_call_operand.vmem [shape: f32[64,1], index: 4, kind: input, shape index: {}]
  %s5 = inlined_call_operand.vmem [shape: bf16[1,64], index: 5, kind: input, shape index: {}]
  %s6 = inlined_call_operand.<no memory space> [shape: f32[1,1], index: 6, kind: input, shape index: {}]
  %s7 = inlined_call_operand.hbm [shape: f32[1,8], index: 7, kind: output, shape index: {}]
  %s8 = sld [smem:[#allocation0]]
  $region38: #{tpu_custom_call.1} parent=0
    _
  %s10 = ssub.s32 1, %s8
  %s11 = scalar_select 0, %s10, %s8
  %v12 = vstv %s6
  %13 = vst [vmem:[#allocation2] sm:$0x1] %v12
  $region1: #{tpu_custom_call.1} parent=0
    #allocation3 [shape = 'u8[512]{0}', space=vmem, size = 0x400, scoped, tag = 'output window, operand 0, single buffered']
    #allocation4 [shape = 's32[1]{0}', space=sflag, size = 0x4, scoped, tag = 'scoped memory for tpu_custom_call.1']
    %14 = vsyncpa [#allocation4], 0
    // Predicated region
    $region2: #{tpu_custom_call.1} parent=1 // pred_check
      _
    $region3: #{tpu_custom_call.1} parent=1 // pred_check_branch
      %16 = sbr.rel (0) target = $region5
    $region4: #{tpu_custom_call.1} parent=1 // pred_region
      _
    $region5: #{tpu_custom_call.1} parent=1 // pred_fallthru
      _
    // Predicated region
    $region6: #{tpu_custom_call.1} parent=1 // pred_check
      _
    $region7: #{tpu_custom_call.1} parent=1 // pred_check_branch
      %18 = sbr.rel (0) target = $region9
    $region8: #{tpu_custom_call.1} parent=1 // pred_region
      _
    $region9: #{tpu_custom_call.1} parent=1 // pred_fallthru
      _
    // Predicated region
    $region10: #{tpu_custom_call.1} parent=1 // pred_check
      _
    $region11: #{tpu_custom_call.1} parent=1 // pred_check_branch
      %20 = sbr.rel (0) target = $region13
    $region12: #{tpu_custom_call.1} parent=1 // pred_region
      _
    $region13: #{tpu_custom_call.1} parent=1 // pred_fallthru
      _
    // Predicated region
    $region14: #{tpu_custom_call.1} parent=1 // pred_check
      _
    $region15: #{tpu_custom_call.1} parent=1 // pred_check_branch
      %22 = sbr.rel (0) target = $region17
    $region16: #{tpu_custom_call.1} parent=1 // pred_region
      _
    $region17: #{tpu_custom_call.1} parent=1 // pred_fallthru
      _
    // Predicated region
    $region18: #{tpu_custom_call.1} parent=1 // pred_check
      _
    $region19: #{tpu_custom_call.1} parent=1 // pred_check_branch
      %24 = sbr.rel (0) target = $region21
    $region20: #{tpu_custom_call.1} parent=1 // pred_region
      _
    $region21: #{tpu_custom_call.1} parent=1 // pred_fallthru
      _
    // Predicated region
    $region22: #{tpu_custom_call.1} parent=1 // pred_check
      _
    $region23: #{tpu_custom_call.1} parent=1 // pred_check_branch
      %26 = sbr.rel (0) target = $region25
    $region24: #{tpu_custom_call.1} parent=1 // pred_region
      _
    $region25: #{tpu_custom_call.1} parent=1 // pred_fallthru
      _
    // Predicated region
    $region26: #{tpu_custom_call.1} parent=1 // pred_check
      _
    $region27: #{tpu_custom_call.1} parent=1 // pred_check_branch
      %28 = sbr.rel (0) target = $region29
    $region28: #{tpu_custom_call.1} parent=1 // pred_region
      _
    $region29: #{tpu_custom_call.1} parent=1 // pred_fallthru
      _
    %v30 = vld [vmem:[%s0] sm:$0xf]
    %v31 = vld [vmem:[%s0 + $0x4] sm:$0x7]
    %v32 = vld [vmem:[%s1] sm:$0xf]
    %v33 = vld [vmem:[%s1 + $0x4] sm:$0xf]
    %v34 = vld [vmem:[%s1 + $0x8] sm:$0xf]
    %v35 = vld [vmem:[%s1 + $0xc] sm:$0xf]
    %v36 = vld [vmem:[%s1 + $0x10] sm:$0xf]
    %v37 = vld [vmem:[%s1 + $0x14] sm:$0xf]
    %v38 = vld [vmem:[%s1 + $0x18] sm:$0xf]
    %v39 = vld [vmem:[%s1 + $0x1c] sm:$0xf]
    %v40 = vld [vmem:[%s2] sm:$0xff]
    %v41 = vld [vmem:[%s2 + $0x8] sm:$0xff]
    %v42 = vld [vmem:[%s2 + $0x10] sm:$0xff]
    %v43 = vld [vmem:[%s2 + $0x18] sm:$0xff]
    %v44 = vld [vmem:[%s2 + $0x20] sm:$0xff]
    %v45 = vld [vmem:[%s2 + $0x28] sm:$0xff]
    %v46 = vld [vmem:[%s2 + $0x30] sm:$0xff]
    %v47 = vld [vmem:[%s2 + $0x38] sm:$0xff]
    %49 = vset.pattern.permute.xlu0 0
    %50 = vperm.xlu0 %49, %v40
    %v51 = vpop.permute.xlu0 %50
    %54 = vset.pattern.permute.xlu0 0
    %55 = vperm.xlu0 %54, %v41
    %v56 = vpop.permute.xlu0 %55
    %59 = vset.pattern.permute.xlu0 0
    %60 = vperm.xlu0 %59, %v42
    %v61 = vpop.permute.xlu0 %60
    %64 = vset.pattern.permute.xlu0 0
    %65 = vperm.xlu0 %64, %v43
    %v66 = vpop.permute.xlu0 %65
    %69 = vset.pattern.permute.xlu0 0
    %70 = vperm.xlu0 %69, %v44
    %v71 = vpop.permute.xlu0 %70
    %74 = vset.pattern.permute.xlu0 0
    %75 = vperm.xlu0 %74, %v45
    %v76 = vpop.permute.xlu0 %75
    %79 = vset.pattern.permute.xlu0 0
    %80 = vperm.xlu0 %79, %v46
    %v81 = vpop.permute.xlu0 %80
    %84 = vset.pattern.permute.xlu0 0
    %85 = vperm.xlu0 %84, %v47
    %v86 = vpop.permute.xlu0 %85
    %v96 = vunpack.c.l.b16 %v32
    %v97 = vunpack.c.l.b16 %v33
    %v98 = vunpack.c.l.b16 %v34
    %v99 = vunpack.c.l.b16 %v35
    %v100 = vunpack.c.l.b16 %v36
    %v101 = vunpack.c.l.b16 %v37
    %v102 = vunpack.c.l.b16 %v38
    %v103 = vunpack.c.l.b16 %v39
    %v104 = vpack.c.b16 %v97, %v96
    %v105 = vpack.c.b16 %v99, %v98
    %v106 = vpack.c.b16 %v101, %v100
    %v107 = vpack.c.b16 %v103, %v102
    %v110 = vunpack.c.l.b16 %v30
    %v111 = vunpack.c.l.b16 %v31
    %v112 = vpack.c.b16 %v111, %v110
    %vm113 = vcmask 113664
    %v115 = vsel %vm113, %v104, 0
    %v118 = vsel %vm113, %v105, 0
    %v121 = vsel %vm113, %v106, 0
    %v124 = vsel %vm113, %v107, 0
    %vm126 = vcmask 1046528
    %v128 = vsel %vm126, %v112, 0
    %130 = vmatprep.subr.bf16.mxu0 0
    %131 = vmatpush1.bf16.msra.mxu0 %v128
    %132 = vmatprep.subr.bf16.mxu0 0
    %133 = vmatpush1.bf16.msra.mxu0 0
    %134 = vmatprep.subr.bf16.mxu0 0
    %135 = vmatpush1.bf16.msra.mxu0 0
    %136 = vmatprep.subr.bf16.mxu0 0
    %137 = vmatpush1.bf16.msra.mxu0 0
    %138 = vmatprep.subr.bf16.mxu0 0
    %139 = vmatpush1.bf16.msra.mxu0 0
    %140 = vmatprep.subr.bf16.mxu0 0
    %141 = vmatpush1.bf16.msra.mxu0 0
    %142 = vmatprep.subr.bf16.mxu0 0
    %143 = vmatpush1.bf16.msra.mxu0 0
    %144 = vmatprep.subr.bf16.mxu0 0
    %145 = vmatpush1.bf16.msra.mxu0 0
    %146 = vmatprep.subr.bf16.mxu0 0
    %147 = vmatpush1.bf16.msra.mxu0 0
    %148 = vmatprep.subr.bf16.mxu0 0
    %149 = vmatpush1.bf16.msra.mxu0 0
    %150 = vmatprep.subr.bf16.mxu0 0
    %151 = vmatpush1.bf16.msra.mxu0 0
    %152 = vmatprep.subr.bf16.mxu0 0
    %153 = vmatpush1.bf16.msra.mxu0 0
    %154 = vmatprep.subr.bf16.mxu0 0
    %155 = vmatpush1.bf16.msra.mxu0 0
    %156 = vmatprep.subr.bf16.mxu0 0
    %157 = vmatpush1.bf16.msra.mxu0 0
    %158 = vmatprep.subr.bf16.mxu0 0
    %159 = vmatpush1.bf16.msra.mxu0 0
    %160 = vmatprep.subr.bf16.mxu0 0
    %161 = vmatpush1.bf16.msra.mxu0 0
    %162 = vmatprep.mubr.bf16.mxu0 0
    %163 = vmatmul.mubr.bf16.gmra.mrb[0].mxu0 %v115
    %v164 = vpop.f32.mrb[0].mxu0
    %v165 = vadd.f32 %v51, %v164
    %v166 = vpop.f32.mrb[0].mxu0
    %v167 = vpop.f32.mrb[0].mxu0
    %v168 = vadd.f32 %v56, %v167
    %v169 = vpop.f32.mrb[0].mxu0
    %170 = vmatprep.mubr.bf16.mxu0 0
    %171 = vmatmul.mubr.bf16.gmra.mrb[0].mxu0 %v118
    %v172 = vpop.f32.mrb[0].mxu0
    %v173 = vadd.f32 %v61, %v172
    %v174 = vpop.f32.mrb[0].mxu0
    %v175 = vpop.f32.mrb[0].mxu0
    %v176 = vadd.f32 %v66, %v175
    %v177 = vpop.f32.mrb[0].mxu0
    %178 = vmatprep.mubr.bf16.mxu0 0
    %179 = vmatmul.mubr.bf16.gmra.mrb[0].mxu0 %v121
    %v180 = vpop.f32.mrb[0].mxu0
    %v181 = vadd.f32 %v71, %v180
    %v182 = vpop.f32.mrb[0].mxu0
    %v183 = vpop.f32.mrb[0].mxu0
    %v184 = vadd.f32 %v76, %v183
    %v185 = vpop.f32.mrb[0].mxu0
    %186 = vmatprep.mubr.bf16.mxu0 0
    %187 = vmatmul.mubr.bf16.gmra.mrb[0].mxu0 %v124
    %v188 = vpop.f32.mrb[0].mxu0
    %v189 = vadd.f32 %v81, %v188
    %v190 = vpop.f32.mrb[0].mxu0
    %v191 = vpop.f32.mrb[0].mxu0
    %v192 = vadd.f32 %v86, %v191
    %v193 = vpop.f32.mrb[0].mxu0
    %194 = vdwg.mxu0
    %v195 = vmax.f32 %v165, 0.0
    %v196 = vmax.f32 %v168, 0.0
    %v197 = vmax.f32 %v173, 0.0
    %v198 = vmax.f32 %v176, 0.0
    %v199 = vmax.f32 %v181, 0.0
    %v200 = vmax.f32 %v184, 0.0
    %v201 = vmax.f32 %v189, 0.0
    %v202 = vmax.f32 %v192, 0.0
    %v203 = vld [vmem:[%s3] sm:$0xf]
    %v204 = vld [vmem:[%s3 + $0x4] sm:$0xf]
    %v205 = vld [vmem:[%s3 + $0x8] sm:$0xf]
    %v206 = vld [vmem:[%s3 + $0xc] sm:$0xf]
    %v207 = vld [vmem:[%s3 + $0x10] sm:$0xf]
    %v208 = vld [vmem:[%s3 + $0x14] sm:$0xf]
    %v209 = vld [vmem:[%s3 + $0x18] sm:$0xf]
    %v210 = vld [vmem:[%s3 + $0x1c] sm:$0xf]
    %v211 = vpack.c.bf16 %v196, %v195
    %v212 = vpack.c.bf16 %v198, %v197
    %v213 = vpack.c.bf16 %v200, %v199
    %v214 = vpack.c.bf16 %v202, %v201
    %v215 = vld [vmem:[%s4] sm:$0xff]
    %v216 = vld [vmem:[%s4 + $0x8] sm:$0xff]
    %v217 = vld [vmem:[%s4 + $0x10] sm:$0xff]
    %v218 = vld [vmem:[%s4 + $0x18] sm:$0xff]
    %v219 = vld [vmem:[%s4 + $0x20] sm:$0xff]
    %v220 = vld [vmem:[%s4 + $0x28] sm:$0xff]
    %v221 = vld [vmem:[%s4 + $0x30] sm:$0xff]
    %v222 = vld [vmem:[%s4 + $0x38] sm:$0xff]
    %224 = vset.pattern.permute.xlu0 0
    %225 = vperm.xlu0 %224, %v215
    %v226 = vpop.permute.xlu0 %225
    %229 = vset.pattern.permute.xlu0 0
    %230 = vperm.xlu0 %229, %v216
    %v231 = vpop.permute.xlu0 %230
    %234 = vset.pattern.permute.xlu0 0
    %235 = vperm.xlu0 %234, %v217
    %v236 = vpop.permute.xlu0 %235
    %239 = vset.pattern.permute.xlu0 0
    %240 = vperm.xlu0 %239, %v218
    %v241 = vpop.permute.xlu0 %240
    %244 = vset.pattern.permute.xlu0 0
    %245 = vperm.xlu0 %244, %v219
    %v246 = vpop.permute.xlu0 %245
    %249 = vset.pattern.permute.xlu0 0
    %250 = vperm.xlu0 %249, %v220
    %v251 = vpop.permute.xlu0 %250
    %254 = vset.pattern.permute.xlu0 0
    %255 = vperm.xlu0 %254, %v221
    %v256 = vpop.permute.xlu0 %255
    %259 = vset.pattern.permute.xlu0 0
    %260 = vperm.xlu0 %259, %v222
    %v261 = vpop.permute.xlu0 %260
    %v271 = vunpack.c.l.b16 %v203
    %v272 = vunpack.c.l.b16 %v204
    %v273 = vunpack.c.l.b16 %v205
    %v274 = vunpack.c.l.b16 %v206
    %v275 = vunpack.c.l.b16 %v207
    %v276 = vunpack.c.l.b16 %v208
    %v277 = vunpack.c.l.b16 %v209
    %v278 = vunpack.c.l.b16 %v210
    %v279 = vpack.c.b16 %v272, %v271
    %v280 = vpack.c.b16 %v274, %v273
    %v281 = vpack.c.b16 %v276, %v275
    %v282 = vpack.c.b16 %v278, %v277
    %vm283 = vcmask 523264
    %v285 = vsel %vm283, %v279, 0
    %v288 = vsel %vm283, %v280, 0
    %v291 = vsel %vm283, %v281, 0
    %v294 = vsel %vm283, %v282, 0
    %296 = vmatprep.subr.bf16.mxu0 0
    %297 = vmatpush1.bf16.msra.mxu0 %v211
    %298 = vmatprep.subr.bf16.mxu0 0
    %299 = vmatpush1.bf16.msra.mxu0 %v212
    %300 = vmatprep.subr.bf16.mxu0 0
    %301 = vmatpush1.bf16.msra.mxu0 %v213
    %302 = vmatprep.subr.bf16.mxu0 0
    %303 = vmatpush1.bf16.msra.mxu0 %v214
    %304 = vmatprep.subr.bf16.mxu0 0
    %305 = vmatpush1.bf16.msra.mxu0 0
    %306 = vmatprep.subr.bf16.mxu0 0
    %307 = vmatpush1.bf16.msra.mxu0 0
    %308 = vmatprep.subr.bf16.mxu0 0
    %309 = vmatpush1.bf16.msra.mxu0 0
    %310 = vmatprep.subr.bf16.mxu0 0
    %311 = vmatpush1.bf16.msra.mxu0 0
    %312 = vmatprep.subr.bf16.mxu0 0
    %313 = vmatpush1.bf16.msra.mxu0 0
    %314 = vmatprep.subr.bf16.mxu0 0
    %315 = vmatpush1.bf16.msra.mxu0 0
    %316 = vmatprep.subr.bf16.mxu0 0
    %317 = vmatpush1.bf16.msra.mxu0 0
    %318 = vmatprep.subr.bf16.mxu0 0
    %319 = vmatpush1.bf16.msra.mxu0 0
    %320 = vmatprep.subr.bf16.mxu0 0
    %321 = vmatpush1.bf16.msra.mxu0 0
    %322 = vmatprep.subr.bf16.mxu0 0
    %323 = vmatpush1.bf16.msra.mxu0 0
    %324 = vmatprep.subr.bf16.mxu0 0
    %325 = vmatpush1.bf16.msra.mxu0 0
    %326 = vmatprep.subr.bf16.mxu0 0
    %327 = vmatpush1.bf16.msra.mxu0 0
    %328 = vmatprep.mubr.bf16.mxu0 0
    %329 = vmatmul.mubr.bf16.gmra.mrb[0].mxu0 %v285
    %v330 = vpop.f32.mrb[0].mxu0
    %v331 = vadd.f32 %v226, %v330
    %v332 = vpop.f32.mrb[0].mxu0
    %v333 = vpop.f32.mrb[0].mxu0
    %v334 = vadd.f32 %v231, %v333
    %v335 = vpop.f32.mrb[0].mxu0
    %336 = vmatprep.mubr.bf16.mxu0 0
    %337 = vmatmul.mubr.bf16.gmra.mrb[0].mxu0 %v288
    %v338 = vpop.f32.mrb[0].mxu0
    %v339 = vadd.f32 %v236, %v338
    %v340 = vpop.f32.mrb[0].mxu0
    %v341 = vpop.f32.mrb[0].mxu0
    %v342 = vadd.f32 %v241, %v341
    %v343 = vpop.f32.mrb[0].mxu0
    %344 = vmatprep.mubr.bf16.mxu0 0
    %345 = vmatmul.mubr.bf16.gmra.mrb[0].mxu0 %v291
    %v346 = vpop.f32.mrb[0].mxu0
    %v347 = vadd.f32 %v246, %v346
    %v348 = vpop.f32.mrb[0].mxu0
    %v349 = vpop.f32.mrb[0].mxu0
    %v350 = vadd.f32 %v251, %v349
    %v351 = vpop.f32.mrb[0].mxu0
    %352 = vmatprep.mubr.bf16.mxu0 0
    %353 = vmatmul.mubr.bf16.gmra.mrb[0].mxu0 %v294
    %v354 = vpop.f32.mrb[0].mxu0
    %v355 = vadd.f32 %v256, %v354
    %v356 = vpop.f32.mrb[0].mxu0
    %v357 = vpop.f32.mrb[0].mxu0
    %v358 = vadd.f32 %v261, %v357
    %v359 = vpop.f32.mrb[0].mxu0
    %360 = vdwg.mxu0
    %v361 = vmax.f32 %v331, 0.0
    %v362 = vmax.f32 %v334, 0.0
    %v363 = vmax.f32 %v339, 0.0
    %v364 = vmax.f32 %v342, 0.0
    %v365 = vmax.f32 %v347, 0.0
    %v366 = vmax.f32 %v350, 0.0
    %v367 = vmax.f32 %v355, 0.0
    %v368 = vmax.f32 %v358, 0.0
    %v369 = vld [vmem:[%s5] sm:$0x1]
    %v370 = vpack.c.bf16 %v362, %v361
    %v371 = vpack.c.bf16 %v364, %v363
    %v372 = vpack.c.bf16 %v366, %v365
    %v373 = vpack.c.bf16 %v368, %v367
    %v374 = vld [vmem:[#allocation2] sm:$0x1]
    %376 = vset.pattern.permute.xlu0 0
    %377 = vperm.xlu0 %376, %v374
    %v378 = vpop.permute.xlu0 %377
    %v380 = vlaneseq
    %v381 = vshrl.u32 %v380, 7
    %v382 = vsub.s32 0, %v381
    %v383 = vrot.slane %v378, %v382
    %v385 = vsel %vm283, %v369, 0
    %387 = vmatprep.subr.bf16.mxu0 0
    %388 = vmatpush1.bf16.msra.mxu0 %v370
    %389 = vmatprep.subr.bf16.mxu0 0
    %390 = vmatpush1.bf16.msra.mxu0 %v371
    %391 = vmatprep.subr.bf16.mxu0 0
    %392 = vmatpush1.bf16.msra.mxu0 %v372
    %393 = vmatprep.subr.bf16.mxu0 0
    %394 = vmatpush1.bf16.msra.mxu0 %v373
    %395 = vmatprep.subr.bf16.mxu0 0
    %396 = vmatpush1.bf16.msra.mxu0 0
    %397 = vmatprep.subr.bf16.mxu0 0
    %398 = vmatpush1.bf16.msra.mxu0 0
    %399 = vmatprep.subr.bf16.mxu0 0
    %400 = vmatpush1.bf16.msra.mxu0 0
    %401 = vmatprep.subr.bf16.mxu0 0
    %402 = vmatpush1.bf16.msra.mxu0 0
    %403 = vmatprep.subr.bf16.mxu0 0
    %404 = vmatpush1.bf16.msra.mxu0 0
    %405 = vmatprep.subr.bf16.mxu0 0
    %406 = vmatpush1.bf16.msra.mxu0 0
    %407 = vmatprep.subr.bf16.mxu0 0
    %408 = vmatpush1.bf16.msra.mxu0 0
    %409 = vmatprep.subr.bf16.mxu0 0
    %410 = vmatpush1.bf16.msra.mxu0 0
    %411 = vmatprep.subr.bf16.mxu0 0
    %412 = vmatpush1.bf16.msra.mxu0 0
    %413 = vmatprep.subr.bf16.mxu0 0
    %414 = vmatpush1.bf16.msra.mxu0 0
    %415 = vmatprep.subr.bf16.mxu0 0
    %416 = vmatpush1.bf16.msra.mxu0 0
    %417 = vmatprep.subr.bf16.mxu0 0
    %418 = vmatpush1.bf16.msra.mxu0 0
    %419 = vmatprep.mubr.bf16.mxu0 0
    %420 = vmatmul.mubr.bf16.gmra.mrb[0].mxu0 %v385
    %v421 = vpop.f32.mrb[0].mxu0
    %v422 = vadd.f32 %v383, %v421
    %v423 = vpop.f32.mrb[0].mxu0
    %v424 = vpop.f32.mrb[0].mxu0
    %v425 = vpop.f32.mrb[0].mxu0
    %426 = vdwg.mxu0
    %vm427 = vcmask 57344
    %428 = vst.msk [vmem:[#allocation3] sm:$0x1] %vm427, %v422
    // Predicated region
    $region30: #{tpu_custom_call.1} parent=1 // pred_check
      _
    $region31: #{tpu_custom_call.1} parent=1 // pred_check_branch
      %430 = sbr.rel (0) target = $region33
    $region32: #{tpu_custom_call.1} parent=1 // pred_region
      %s432 = ssub.s32 16, 16
      %433 = vsyncadd [#allocation4], %s432
      %s435 = sshll.u32 [#allocation3], 4
      %s436 = int_to_ptr.vmem [resolvable:$true] %s435
      %438 = dma.vmem_to_hbm [thread:$0]  %s436, 16, %s7, [#allocation4]
    $region33: #{tpu_custom_call.1} parent=1 // pred_fallthru
      _
    // Predicated region
    $region34: #{tpu_custom_call.1} parent=1 // pred_check
      _
    $region35: #{tpu_custom_call.1} parent=1 // pred_check_branch
      %440 = sbr.rel (0) target = $region37
    $region36: #{tpu_custom_call.1} parent=1 // pred_region
      %441 = dma.done [#allocation4], 16
    $region37: #{tpu_custom_call.1} parent=1 // pred_fallthru
      _
    %442 = vsyncpa [#allocation4], 1

</llo_original>
